<compile_context>
chip_gen: v5e
topology: v5e:2x2
jax: 0.10.0
libtpu: 0.0.40
codegen_flags: <defaults>
</compile_context>

<pallas_src>
import math
import functools

import jax
import jax.numpy as jnp
from jax.experimental import pallas as pl
from jax.experimental.pallas import tpu as pltpu


# ---------------------------------------------------------------------------
# Kernel
# ---------------------------------------------------------------------------
def mdec_encoder_kernel(x_ref, w1_ref, b1_ref, w2_ref, b2_ref, z_ref):
    # Cast x to the weight compute dtype on the VPU (free filler under the MXU;
    # a no-op when the prepared weights are f32).
    x = x_ref[...].astype(w1_ref.dtype)
    # layer 1: Linear(input_dim -> hidden) on the MXU, f32 accumulation,
    #          bias add + ReLU in f32 on the VPU.
    h = jnp.dot(x, w1_ref[...], preferred_element_type=jnp.float32)
    h = jnp.maximum(h + b1_ref[...], 0.0)
    # layer 2 (_enc_mu): Linear(hidden -> z_dim), no activation.
    z = jnp.dot(h.astype(w2_ref.dtype), w2_ref[...],
                preferred_element_type=jnp.float32)
    z_ref[...] = (z + b2_ref[...]).astype(z_ref.dtype)


# ---------------------------------------------------------------------------
# Helpers
# ---------------------------------------------------------------------------
def _round_up(n, m):
    return ((n + m - 1) // m) * m


@functools.lru_cache(maxsize=None)
def _vmem_budgets():
    """Generation-aware (tile budget, vmem_limit_bytes)."""
    try:
        cap = pltpu.get_tpu_info().vmem_capacity_bytes
    except Exception:
        cap = 64 * 1024 * 1024  # conservative fallback (v7x-sized)
    if cap >= 128 * 1024 * 1024:          # v5e / v6e: 128 MiB VMEM per TC
        return 56 * 1024 * 1024, 100 * 1024 * 1024
    return 24 * 1024 * 1024, 48 * 1024 * 1024   # v7x: 64 MiB per TC


def _tile_vmem_bytes(tb, d, h_pad, z, x_itemsize, compute_itemsize, out_itemsize):
    """Conservative VMEM usage estimate for one grid step."""
    d_l = _round_up(d, 128)   # layout lane-pads the last dim of the x block
    z_l = _round_up(z, 128)   # layout lane-pads the last dim of the out block
    x_bufs = 2 * tb * d_l * x_itemsize                     # double-buffered x tiles
    o_bufs = 2 * tb * z_l * out_itemsize                   # double-buffered out tiles
    weights = 2 * (d_l * h_pad + h_pad * z_l) * compute_itemsize   # count x2 (be safe)
    biases = 2 * (h_pad + z_l) * 4
    interm = tb * h_pad * (4 + compute_itemsize) + tb * z_l * 4    # f32 h, cast h, f32 z
    return x_bufs + o_bufs + weights + biases + interm


# ---------------------------------------------------------------------------
# One-time parameter preparation (pad + cast hoisted out of the forward)
# ---------------------------------------------------------------------------
def prepare_mdec_encoder_params(w1, b1, w2, b2, compute_dtype=jnp.bfloat16):
    """w1: (D, H), b1: (1, H), w2: (H, Z), b2: (1, Z); weights already transposed
    to (in_features, out_features).

    Returns (w1p, b1p, w2p, b2p) with the hidden dim zero-padded to a multiple
    of 128 lanes and weights cast to compute_dtype.  Padding is exact: padded
    hidden columns are ReLU(0)=0 and multiply zero-padded w2 rows.
    """
    H = w1.shape[1]
    H_pad = _round_up(H, 128)
    w1p = jnp.pad(w1, ((0, 0), (0, H_pad - H))).astype(compute_dtype)
    b1p = jnp.pad(b1, ((0, 0), (0, H_pad - H))).astype(jnp.float32)
    w2p = jnp.pad(w2, ((0, H_pad - H), (0, 0))).astype(compute_dtype)
    b2p = b2.astype(jnp.float32)
    return w1p, b1p, w2p, b2p


# ---------------------------------------------------------------------------
# Forward wrapper
# ---------------------------------------------------------------------------
@functools.partial(jax.jit, static_argnames=("block_b", "target_steps", "out_dtype"))
def mdec_encoder_forward(x, w1p, b1p, w2p, b2p, *,
                         block_b=1024, target_steps=4, out_dtype=None):
    """x: (B, D) (any float dtype, kept as-is in HBM; cast in-kernel).
    w1p/b1p/w2p/b2p: prepared via prepare_mdec_encoder_params().
    Returns z: (B, Z) in out_dtype (default x.dtype)."""
    B, D = x.shape
    H_pad = w1p.shape[1]
    Z = w2p.shape[1]

    out_dtype = x.dtype if out_dtype is None else out_dtype
    x_itemsize = jnp.dtype(x.dtype).itemsize
    compute_itemsize = jnp.dtype(w1p.dtype).itemsize
    out_itemsize = jnp.dtype(out_dtype).itemsize

    # ---- batch-tile selection -------------------------------------------
    # Aim for >= target_steps grid steps (v7x has 2 TCs; a grid of 1 idles one
    # of them and disables software pipelining), then shrink until the tile
    # fits the generation-aware VMEM budget.
    vmem_budget, vmem_limit = _vmem_budgets()
    TB = max(8, _round_up(-(-B // target_steps), 8))      # ~B/target_steps, mult of 8
    TB = min(TB, block_b, _round_up(B, 8))
    while TB > 8 and _tile_vmem_bytes(TB, D, H_pad, Z, x_itemsize,
                                      compute_itemsize, out_itemsize) > vmem_budget:
        TB = max(8, _round_up(TB // 2, 8))
    grid = (pl.cdiv(B, TB),)

    # TODO(synk): for very large input_dim a K grid axis ("arbitrary", last) with
    # an f32 accumulator scratch would keep the x tile at (TB, TK); not needed
    # for typical MDEC input sizes (e.g. 784).
    # TODO(synk): if profiling shows exposed x/out DMA with small tiles, sweep
    # pipeline_mode=pl.Buffered(3) on the x in_spec / out_spec.

    cost = pl.CostEstimate(
        flops=2 * B * (D * H_pad + H_pad * Z),
        transcendentals=0,
        bytes_accessed=(B * D * x_itemsize
                        + (D * H_pad + H_pad * Z) * compute_itemsize
                        + (H_pad + Z) * 4
                        + B * Z * out_itemsize),
    )

    z = pl.pallas_call(
        mdec_encoder_kernel,
        out_shape=jax.ShapeDtypeStruct((B, Z), out_dtype),
        grid=grid,
        in_specs=[
            pl.BlockSpec((TB, D), lambda i: (i, 0)),         # x: streamed per tile
            pl.BlockSpec((D, H_pad), lambda i: (0, 0)),      # w1: VMEM-resident
            pl.BlockSpec((1, H_pad), lambda i: (0, 0)),      # b1
            pl.BlockSpec((H_pad, Z), lambda i: (0, 0)),      # w2 (last dim == full Z)
            pl.BlockSpec((1, Z), lambda i: (0, 0)),          # b2
        ],
        out_specs=pl.BlockSpec((TB, Z), lambda i: (i, 0)),   # unpadded output block
        compiler_params=pltpu.CompilerParams(
            dimension_semantics=("parallel",),
            vmem_limit_bytes=vmem_limit,
        ),
        cost_estimate=cost,
    )(x, w1p, b1p, w2p, b2p)

    return z


# ---------------------------------------------------------------------------
# Init + reference
# ---------------------------------------------------------------------------
def init_linear_params(key, fan_in, fan_out, dtype=jnp.float32):
    """torch.nn.Linear default init: U(-1/sqrt(fan_in), 1/sqrt(fan_in)).
    Weight returned already transposed to (fan_in, fan_out); bias (1, fan_out)."""
    kw, kb = jax.random.split(key)
    bound = 1.0 / math.sqrt(fan_in)
    w = jax.random.uniform(kw, (fan_in, fan_out), dtype, -bound, bound)
    b = jax.random.uniform(kb, (1, fan_out), dtype, -bound, bound)
    return w, b


def reference_forward(x, w1, b1, w2, b2):
    h = jnp.maximum(x @ w1 + b1, 0.0)
    return h @ w2 + b2


# ---------------------------------------------------------------------------
# Test
# ---------------------------------------------------------------------------
if __name__ == "__main__":
    # Small shapes consistent with MDEC_encoder(input_dim, encodeLayer=[hidden], z_dim)
    batch, input_dim, hidden, z_dim = 8, 64, 32, 16
    n_clusters = 10  # `mu` (n_clusters, z_dim) is unused in forward()

    key = jax.random.PRNGKey(0)
    kx, k1, k2, kx2 = jax.random.split(key, 4)

    x = jax.random.normal(kx, (batch, input_dim), jnp.float32)
    w1, b1 = init_linear_params(k1, input_dim, hidden)   # encoder Linear
    w2, b2 = init_linear_params(k2, hidden, z_dim)       # _enc_mu Linear

    z_ref = reference_forward(x, w1, b1, w2, b2)

    # f32 compute path: bit-for-bit-ish vs reference.
    p_f32 = prepare_mdec_encoder_params(w1, b1, w2, b2, compute_dtype=jnp.float32)
    z_f32 = jax.block_until_ready(mdec_encoder_forward(x, *p_f32))
    assert z_f32.shape == (batch, z_dim)
    assert jnp.allclose(z_f32, z_ref, atol=1e-5, rtol=1e-5), "f32 mismatch vs reference"

    # bf16 MXU operands + f32 accumulation (default perf path); params prepared once.
    p_bf16 = prepare_mdec_encoder_params(w1, b1, w2, b2, compute_dtype=jnp.bfloat16)
    z_bf16 = jax.block_until_ready(mdec_encoder_forward(x, *p_bf16))
    assert z_bf16.shape == (batch, z_dim)
    assert jnp.allclose(z_bf16, z_ref, atol=1e-1, rtol=5e-2), "bf16 mismatch vs reference"

    # Exercise a multi-step grid with a partial last tile (80 rows).
    xb = jax.random.normal(kx2, (80, input_dim), jnp.float32)
    zb = jax.block_until_ready(
        mdec_encoder_forward(xb, *p_f32, block_b=32, target_steps=4))
    zb_ref = reference_forward(xb, w1, b1, w2, b2)
    assert zb.shape == (80, z_dim)
    assert jnp.allclose(zb, zb_ref, atol=1e-5, rtol=1e-5), "tiled-grid mismatch vs reference"

    print("KERNEL_OK")
</pallas_src>

<mosaic_0001>
module attributes {stable_mosaic.version = 11 : i64} {
  func.func @mdec_encoder_kernel(%arg0: i32, %arg1: memref<8x64xf32, #tpu.memory_space<vmem>>, %arg2: memref<64x128xf32, #tpu.memory_space<vmem>>, %arg3: memref<1x128xf32, #tpu.memory_space<vmem>>, %arg4: memref<128x16xf32, #tpu.memory_space<vmem>>, %arg5: memref<1x16xf32, #tpu.memory_space<vmem>>, %arg6: memref<8x16xf32, #tpu.memory_space<vmem>>) attributes {dimension_semantics = [#tpu.dimension_semantics<parallel>], iteration_bounds = array<i64: 1>, scalar_prefetch = 0 : i64, scratch_operands = 0 : i64, tpu.core_type = #tpu.core_type<tc>, window_params = [{transform_indices = @transform_0, window_bounds = array<i64: 8, 64>}, {pipeline_mode = #tpu.pipeline_mode<synchronous>, transform_indices = @transform_1, window_bounds = array<i64: 64, 128>}, {pipeline_mode = #tpu.pipeline_mode<synchronous>, transform_indices = @transform_2, window_bounds = array<i64: 1, 128>}, {pipeline_mode = #tpu.pipeline_mode<synchronous>, transform_indices = @transform_3, window_bounds = array<i64: 128, 16>}, {pipeline_mode = #tpu.pipeline_mode<synchronous>, transform_indices = @transform_4, window_bounds = array<i64: 1, 16>}, {transform_indices = @transform_5, window_bounds = array<i64: 8, 16>}]} {
    %c0 = arith.constant 0 : index
    %c0_0 = arith.constant 0 : index
    %0 = vector.load %arg1[%c0, %c0_0] : memref<8x64xf32, #tpu.memory_space<vmem>>, vector<8x64xf32>
    %c0_1 = arith.constant 0 : index
    %c0_2 = arith.constant 0 : index
    %1 = vector.load %arg2[%c0_1, %c0_2] : memref<64x128xf32, #tpu.memory_space<vmem>>, vector<64x128xf32>
    %cst = arith.constant dense<0.000000e+00> : vector<8x128xf32>
    %2 = tpu.matmul %0, %1, %cst {dimension_numbers = #tpu.dot_dimension_numbers<[1], [0], [0], [1], [0, 0, 1, 1], [], []>} : vector<8x64xf32>, vector<64x128xf32>, vector<8x128xf32> -> vector<8x128xf32>
    %c0_3 = arith.constant 0 : index
    %c0_4 = arith.constant 0 : index
    %3 = vector.load %arg3[%c0_3, %c0_4] : memref<1x128xf32, #tpu.memory_space<vmem>>, vector<1x128xf32>
    %4 = vector.broadcast %3 : vector<1x128xf32> to vector<8x128xf32>
    %5 = arith.addf %2, %4 : vector<8x128xf32>
    %cst_5 = arith.constant 0.000000e+00 : f32
    %6 = vector.broadcast %cst_5 : f32 to vector<8x128xf32>
    %7 = arith.maximumf %5, %6 : vector<8x128xf32>
    %c0_6 = arith.constant 0 : index
    %c0_7 = arith.constant 0 : index
    %8 = vector.load %arg4[%c0_6, %c0_7] : memref<128x16xf32, #tpu.memory_space<vmem>>, vector<128x16xf32>
    %cst_8 = arith.constant dense<0.000000e+00> : vector<8x16xf32>
    %9 = tpu.matmul %7, %8, %cst_8 {dimension_numbers = #tpu.dot_dimension_numbers<[1], [0], [0], [1], [0, 0, 1, 1], [], []>} : vector<8x128xf32>, vector<128x16xf32>, vector<8x16xf32> -> vector<8x16xf32>
    %c0_9 = arith.constant 0 : index
    %c0_10 = arith.constant 0 : index
    %10 = vector.load %arg5[%c0_9, %c0_10] : memref<1x16xf32, #tpu.memory_space<vmem>>, vector<1x16xf32>
    %11 = vector.broadcast %10 : vector<1x16xf32> to vector<8x16xf32>
    %12 = arith.addf %9, %11 : vector<8x16xf32>
    %c0_11 = arith.constant 0 : index
    %c0_12 = arith.constant 0 : index
    %13 = vector.load %arg6[%c0_11, %c0_12] : memref<8x16xf32, #tpu.memory_space<vmem>>, vector<8x16xf32>
    tpu.vector_store %arg6[%c0_11, %c0_12], %12 {strides = array<i32>} : memref<8x16xf32, #tpu.memory_space<vmem>>, vector<8x16xf32>,
    return
  }
  func.func @transform_0(%arg0: i32) -> (i32, i32) {
    %c0_i32 = arith.constant 0 : i32
    %c0_i32_0 = arith.constant 0 : i32
    return %arg0, %c0_i32 : i32, i32
  }
  func.func @transform_1(%arg0: i32) -> (i32, i32) {
    %c0_i32 = arith.constant 0 : i32
    %c0_i32_0 = arith.constant 0 : i32
    %c0_i32_1 = arith.constant 0 : i32
    return %c0_i32, %c0_i32_0 : i32, i32
  }
  func.func @transform_2(%arg0: i32) -> (i32, i32) {
    %c0_i32 = arith.constant 0 : i32
    %c0_i32_0 = arith.constant 0 : i32
    %c0_i32_1 = arith.constant 0 : i32
    return %c0_i32, %c0_i32_0 : i32, i32
  }
  func.func @transform_3(%arg0: i32) -> (i32, i32) {
    %c0_i32 = arith.constant 0 : i32
    %c0_i32_0 = arith.constant 0 : i32
    %c0_i32_1 = arith.constant 0 : i32
    return %c0_i32, %c0_i32_0 : i32, i32
  }
  func.func @transform_4(%arg0: i32) -> (i32, i32) {
    %c0_i32 = arith.constant 0 : i32
    %c0_i32_0 = arith.constant 0 : i32
    %c0_i32_1 = arith.constant 0 : i32
    return %c0_i32, %c0_i32_0 : i32, i32
  }
  func.func @transform_5(%arg0: i32) -> (i32, i32) {
    %c0_i32 = arith.constant 0 : i32
    %c0_i32_0 = arith.constant 0 : i32
    return %arg0, %c0_i32 : i32, i32
  }
}

</mosaic_0001>

<llo_original>
// kernel: mdec_encoder_forward.1
$region0: #{mdec_encoder_forward.1}
  #allocation0 [shape = 'u32[]', space=smem, size = 0x4, offset = 0x4, fixed_abs, tag = 'smem constant byte address 0x4 - core index']
  #allocation1 [shape = 'u32[72,128]{1,0:T(1,128)}', space=vmem, size = 0x9000, scoped, tag = 'internal scratch']
  %s0 = inlined_call_operand.vmem [shape: f32[8,64], index: 0, kind: input, shape index: {}]
  %s1 = inlined_call_operand.vmem [shape: f32[64,128], index: 1, kind: input, shape index: {}]
  %s2 = inlined_call_operand.vmem [shape: f32[1,128], index: 2, kind: input, shape index: {}]
  %s3 = inlined_call_operand.vmem [shape: f32[128,16], index: 3, kind: input, shape index: {}]
  %s4 = inlined_call_operand.vmem [shape: f32[1,16], index: 4, kind: input, shape index: {}]
  %s5 = inlined_call_operand.hbm [shape: f32[8,16], index: 5, kind: output, shape index: {}]
  %s6 = sld [smem:[#allocation0]]
  $region30: #{mdec_encoder_forward.1} parent=0
    _
  %s8 = ssub.s32 1, %s6
  %s9 = scalar_select 0, %s8, %s6
  $region1: #{mdec_encoder_forward.1} parent=0
    #allocation2 [shape = 'u8[4096]{0}', space=vmem, size = 0x1000, scoped, tag = 'output window, operand 0, single buffered']
    #allocation3 [shape = 's32[1]{0}', space=sflag, size = 0x4, scoped, tag = 'scoped memory for mdec_encoder_forward.1']
    %10 = vsyncpa [#allocation3], 0
    // Predicated region
    $region2: #{mdec_encoder_forward.1} parent=1 // pred_check
      _
    $region3: #{mdec_encoder_forward.1} parent=1 // pred_check_branch
      %12 = sbr.rel (0) target = $region5
    $region4: #{mdec_encoder_forward.1} parent=1 // pred_region
      _
    $region5: #{mdec_encoder_forward.1} parent=1 // pred_fallthru
      _
    // Predicated region
    $region6: #{mdec_encoder_forward.1} parent=1 // pred_check
      _
    $region7: #{mdec_encoder_forward.1} parent=1 // pred_check_branch
      %14 = sbr.rel (0) target = $region9
    $region8: #{mdec_encoder_forward.1} parent=1 // pred_region
      _
    $region9: #{mdec_encoder_forward.1} parent=1 // pred_fallthru
      _
    // Predicated region
    $region10: #{mdec_encoder_forward.1} parent=1 // pred_check
      _
    $region11: #{mdec_encoder_forward.1} parent=1 // pred_check_branch
      %16 = sbr.rel (0) target = $region13
    $region12: #{mdec_encoder_forward.1} parent=1 // pred_region
      _
    $region13: #{mdec_encoder_forward.1} parent=1 // pred_fallthru
      _
    // Predicated region
    $region14: #{mdec_encoder_forward.1} parent=1 // pred_check
      _
    $region15: #{mdec_encoder_forward.1} parent=1 // pred_check_branch
      %18 = sbr.rel (0) target = $region17
    $region16: #{mdec_encoder_forward.1} parent=1 // pred_region
      _
    $region17: #{mdec_encoder_forward.1} parent=1 // pred_fallthru
      _
    // Predicated region
    $region18: #{mdec_encoder_forward.1} parent=1 // pred_check
      _
    $region19: #{mdec_encoder_forward.1} parent=1 // pred_check_branch
      %20 = sbr.rel (0) target = $region21
    $region20: #{mdec_encoder_forward.1} parent=1 // pred_region
      _
    $region21: #{mdec_encoder_forward.1} parent=1 // pred_fallthru
      _
    %v21 = vld [vmem:[%s0] sm:$0xff]
    %v22 = vld [vmem:[%s1] sm:$0xff]
    %v23 = vld [vmem:[%s1 + $0x8] sm:$0xff]
    %v24 = vld [vmem:[%s1 + $0x10] sm:$0xff]
    %v25 = vld [vmem:[%s1 + $0x18] sm:$0xff]
    %v26 = vld [vmem:[%s1 + $0x20] sm:$0xff]
    %v27 = vld [vmem:[%s1 + $0x28] sm:$0xff]
    %v28 = vld [vmem:[%s1 + $0x30] sm:$0xff]
    %v29 = vld [vmem:[%s1 + $0x38] sm:$0xff]
    %v30 = vld [vmem:[%s2] sm:$0x1]
    %v32 = vperm.slane %v30, 0
    %vm34 = vcmask 523264
    %v36 = vsel %vm34, %v21, 0
    %38 = vmatpush.msra.mxu0 0.0
    %39 = vmatpush.msra.mxu0 0.0
    %40 = vmatpush.msra.mxu0 0.0
    %41 = vmatpush.msra.mxu0 0.0
    %42 = vmatpush.msra.mxu0 0.0
    %43 = vmatpush.msra.mxu0 0.0
    %44 = vmatpush.msra.mxu0 0.0
    %45 = vmatpush.msra.mxu0 0.0
    %46 = vmatpush.msra.mxu0 %v29
    %47 = vmatpush.msra.mxu0 %v28
    %48 = vmatpush.msra.mxu0 %v27
    %49 = vmatpush.msra.mxu0 %v26
    %50 = vmatpush.msra.mxu0 %v25
    %51 = vmatpush.msra.mxu0 %v24
    %52 = vmatpush.msra.mxu0 %v23
    %53 = vmatpush.msra.mxu0 %v22
    %54 = vmatmul.f32.gmra.mxu0 %v36
    %v55 = vpop.f32.mrf.mxu0
    %v56 = vadd.f32 %v32, %v55
    %57 = vdwg.mxu0
    %v58 = vmax.f32 %v56, 0.0
    %v59 = vld [vmem:[%s3] sm:$0xff]
    %v60 = vld [vmem:[%s3 + $0x8] sm:$0xff]
    %v61 = vld [vmem:[%s3 + $0x10] sm:$0xff]
    %v62 = vld [vmem:[%s3 + $0x18] sm:$0xff]
    %v63 = vld [vmem:[%s3 + $0x20] sm:$0xff]
    %v64 = vld [vmem:[%s3 + $0x28] sm:$0xff]
    %v65 = vld [vmem:[%s3 + $0x30] sm:$0xff]
    %v66 = vld [vmem:[%s3 + $0x38] sm:$0xff]
    %v67 = vld [vmem:[%s3 + $0x40] sm:$0xff]
    %v68 = vld [vmem:[%s3 + $0x48] sm:$0xff]
    %v69 = vld [vmem:[%s3 + $0x50] sm:$0xff]
    %v70 = vld [vmem:[%s3 + $0x58] sm:$0xff]
    %v71 = vld [vmem:[%s3 + $0x60] sm:$0xff]
    %v72 = vld [vmem:[%s3 + $0x68] sm:$0xff]
    %v73 = vld [vmem:[%s3 + $0x70] sm:$0xff]
    %v74 = vld [vmem:[%s3 + $0x78] sm:$0xff]
    %v75 = vld [vmem:[%s4] sm:$0x1]
    %v77 = vperm.slane %v75, 0
    %79 = vmatpush.msra.mxu0 %v74
    %80 = vmatpush.msra.mxu0 %v73
    %81 = vmatpush.msra.mxu0 %v72
    %82 = vmatpush.msra.mxu0 %v71
    %83 = vmatpush.msra.mxu0 %v70
    %84 = vmatpush.msra.mxu0 %v69
    %85 = vmatpush.msra.mxu0 %v68
    %86 = vmatpush.msra.mxu0 %v67
    %87 = vmatpush.msra.mxu0 %v66
    %88 = vmatpush.msra.mxu0 %v65
    %89 = vmatpush.msra.mxu0 %v64
    %90 = vmatpush.msra.mxu0 %v63
    %91 = vmatpush.msra.mxu0 %v62
    %92 = vmatpush.msra.mxu0 %v61
    %93 = vmatpush.msra.mxu0 %v60
    %94 = vmatpush.msra.mxu0 %v59
    %95 = vmatmul.f32.gmra.mxu0 %v58
    %v96 = vpop.f32.mrf.mxu0
    %v97 = vadd.f32 %v77, %v96
    %98 = vdwg.mxu0
    %vm99 = vcmask 130048
    %100 = vst.msk [vmem:[#allocation2] sm:$0xff] %vm99, %v97
    // Predicated region
    $region22: #{mdec_encoder_forward.1} parent=1 // pred_check
      _
    $region23: #{mdec_encoder_forward.1} parent=1 // pred_check_branch
      %102 = sbr.rel (0) target = $region25
    $region24: #{mdec_encoder_forward.1} parent=1 // pred_region
      %104 = vsyncadd [#allocation3], 0
      %s106 = sshll.u32 [#allocation2], 4
      %s107 = int_to_ptr.vmem [resolvable:$true] %s106
      %s108 = sshll.u32 %s5, 4
      %s109 = int_to_ptr.hbm [resolvable:$true] %s108
      %111 = dma.vmem_to_hbm [thread:$0]  %s107, 128, %s109, [#allocation3]
    $region25: #{mdec_encoder_forward.1} parent=1 // pred_fallthru
      _
    // Predicated region
    $region26: #{mdec_encoder_forward.1} parent=1 // pred_check
      _
    $region27: #{mdec_encoder_forward.1} parent=1 // pred_check_branch
      %113 = sbr.rel (0) target = $region29
    $region28: #{mdec_encoder_forward.1} parent=1 // pred_region
      %115 = dma.done [#allocation3], 128
    $region29: #{mdec_encoder_forward.1} parent=1 // pred_fallthru
      _
    %116 = vsyncpa [#allocation3], 1

</llo_original>
